<compile_context>
chip_gen: v6e
topology: v6e:2x2x1
jax: 0.10.0
libtpu: 0.0.40
codegen_flags: <defaults>
</compile_context>

<pallas_src>
import functools

import jax
import jax.numpy as jnp
from jax import lax
from jax.experimental import pallas as pl
from jax.experimental.pallas import tpu as pltpu


def _lstm_kernel(x_ref,                 # (S*B, D)   time-major, flattened
                 wx4_ref,               # (D, 4H)    [Wgx | .5*Wix | .5*Wfx | .5*Wox]
                 wh4_ref,               # (H, 4H)    [Wgh | .5*Wih | .5*Wfh | .5*Woh]
                 b4_ref,                # (1, 4H)    [bg  | .5*bi  | .5*bf  | .5*bo ]
                 wph_ref,               # (H, O)
                 bp_ref,                # (1, O)
                 y_ref,                 # (B, O)     softmax output
                 *, seq_len, batch, hidden_dim):
    S, B, H = seq_len, batch, hidden_dim

    # --- Hoisted input projection: one tall matmul, result kept in vregs. ---
    xp = (jnp.dot(x_ref[...], wx4_ref[...],
                  preferred_element_type=jnp.float32)
          + b4_ref[...])                                   # (S*B, 4H)

    wh4 = wh4_ref[...]          # recurrent weights resident in vregs (4 vregs)

    # Lane-masked affine constants (hoisted out of the loop).
    # Gate columns are [g | i | f | o]; i/f/o pre-activations were pre-scaled
    # by 0.5 in the wrapper, so one full-vreg tanh + (a*t + b) yields
    #   g = tanh(pre_g),  i/f/o = sigmoid(pre_{i/f/o}) = 0.5*tanh(pre/2)+0.5.
    lane = lax.broadcasted_iota(jnp.int32, (B, 4 * H), 1)
    a_vec = jnp.where(lane < H, 1.0, 0.5).astype(jnp.float32)
    b_vec = jnp.where(lane < H, 0.0, 0.5).astype(jnp.float32)

    # --- Sequential recurrence, fully unrolled (static vreg-aligned slices). ---
    h = jnp.zeros((B, H), jnp.float32)
    c = jnp.zeros((B, H), jnp.float32)
    for t in range(S):
        pre = (xp[t * B:(t + 1) * B, :]
               + jnp.dot(h, wh4, preferred_element_type=jnp.float32))  # (B, 4H)
        act = a_vec * jnp.tanh(pre) + b_vec        # 1 EUP push + 1 VPU FMA
        g_t = act[:, 0 * H:1 * H]
        i_t = act[:, 1 * H:2 * H]
        f_t = act[:, 2 * H:3 * H]
        o_t = act[:, 3 * H:4 * H]
        c = g_t * i_t + c * f_t
        h = jnp.tanh(c) * o_t

    # --- Final projection + softmax (dim=1). ---
    # NOTE: O=10 < 128 -> masked store; fine for this single tiny store.
    p = (jnp.dot(h, wph_ref[...], preferred_element_type=jnp.float32)
         + bp_ref[...])
    p = p - jnp.max(p, axis=1, keepdims=True)
    e = jnp.exp(p)
    y_ref[...] = (e / jnp.sum(e, axis=1, keepdims=True)).astype(y_ref.dtype)


@functools.partial(jax.jit, static_argnames=("input_dim", "hidden_dim", "output_dim"))
def lstm_forward(x_bsd, params, *, input_dim, hidden_dim, output_dim):
    """x_bsd: (batch, seq, input_dim). Returns softmax probs (batch, output_dim)."""
    B, S, D = x_bsd.shape
    assert D == input_dim
    H, O = hidden_dim, output_dim

    (wgx, wgh, bg, wix, wih, bi, wfx, wfh, bf, wox, woh, bo, wph, bp) = params

    # Fuse the four gates into (D,4H)/(H,4H)/(1,4H) and pre-scale the i/f/o
    # columns by 0.5 so the kernel can use a single full-vreg tanh per step
    # (sigmoid(z) = 0.5*tanh(z/2) + 0.5).  4H = 128 -> full lane width.
    wx4 = jnp.concatenate([wgx, 0.5 * wix, 0.5 * wfx, 0.5 * wox], axis=1)  # (D, 4H)
    wh4 = jnp.concatenate([wgh, 0.5 * wih, 0.5 * wfh, 0.5 * woh], axis=1)  # (H, 4H)
    b4 = jnp.concatenate([bg, 0.5 * bi, 0.5 * bf, 0.5 * bo], axis=1)       # (1, 4H)

    # Time-major, then flatten (S, B, D) -> (S*B, D): one tall input-projection
    # matmul inside the kernel, rows for step t are the vreg-aligned slice
    # [t*B, (t+1)*B).
    x = jnp.transpose(x_bsd, (1, 0, 2)).reshape(S * B, D)

    kernel = functools.partial(_lstm_kernel, seq_len=S, batch=B, hidden_dim=H)

    # No grid: the kernel runs once with every operand fully VMEM-resident
    # (no double-buffering, no pipeline prologue/epilogue).
    # TODO(synk): if S*B grows large (esp. on v7x with 64 MiB VMEM), re-introduce
    # a time-chunk grid axis ('arbitrary') with h/c carried in VMEM scratch.
    vmem_spec = pl.BlockSpec(memory_space=pltpu.MemorySpace.VMEM)

    return pl.pallas_call(
        kernel,
        out_shape=jax.ShapeDtypeStruct((B, O), jnp.float32),
        in_specs=[vmem_spec] * 6,
        out_specs=vmem_spec,
    )(x, wx4, wh4, b4, wph, bp)


def init_params(key, input_dim, hidden_dim, output_dim):
    """Deterministic param init (uniform, PyTorch-Linear-style bounds).
    Weight matrices are stored transposed: (in_features, out_features).
    Gate layout matches the hand-rolled PyTorch module above (g, i, f, o),
    with one bias per gate (only the W*h Linears have bias=True)."""
    ks = jax.random.split(key, 14)
    bx = 1.0 / jnp.sqrt(input_dim)
    bh = 1.0 / jnp.sqrt(hidden_dim)
    u = lambda k, shape, b: jax.random.uniform(k, shape, jnp.float32, -b, b)
    wgx = u(ks[0], (input_dim, hidden_dim), bx)
    wgh = u(ks[1], (hidden_dim, hidden_dim), bh)
    bg = u(ks[2], (1, hidden_dim), bh)
    wix = u(ks[3], (input_dim, hidden_dim), bx)
    wih = u(ks[4], (hidden_dim, hidden_dim), bh)
    bi = u(ks[5], (1, hidden_dim), bh)
    wfx = u(ks[6], (input_dim, hidden_dim), bx)
    wfh = u(ks[7], (hidden_dim, hidden_dim), bh)
    bf = u(ks[8], (1, hidden_dim), bh)
    wox = u(ks[9], (input_dim, hidden_dim), bx)
    woh = u(ks[10], (hidden_dim, hidden_dim), bh)
    bo = u(ks[11], (1, hidden_dim), bh)
    wph = u(ks[12], (hidden_dim, output_dim), bh)
    bp = u(ks[13], (1, output_dim), bh)
    return (wgx, wgh, bg, wix, wih, bi, wfx, wfh, bf, wox, woh, bo, wph, bp)


def lstm_reference(x_bsd, params):
    """Pure-JAX reference mirroring the PyTorch forward, for verification."""
    (wgx, wgh, bg, wix, wih, bi, wfx, wfh, bf, wox, woh, bo, wph, bp) = params
    B, S, D = x_bsd.shape
    H = wgh.shape[0]
    h = jnp.zeros((B, H), jnp.float32)
    c = jnp.zeros((B, H), jnp.float32)
    for t in range(S):
        xt = x_bsd[:, t, :]
        g = jnp.tanh(xt @ wgx + h @ wgh + bg)
        i = jax.nn.sigmoid(xt @ wix + h @ wih + bi)
        f = jax.nn.sigmoid(xt @ wfx + h @ wfh + bf)
        o = jax.nn.sigmoid(xt @ wox + h @ woh + bo)
        c = g * i + c * f
        h = jnp.tanh(c) * o
    p = h @ wph + bp
    return jax.nn.softmax(p, axis=1)


if __name__ == "__main__":
    input_dim, hidden_dim, output_dim = 16, 32, 10   # 4H = 128 -> full lanes
    batch, seq = 8, 8

    key = jax.random.PRNGKey(0)
    kx, kp = jax.random.split(key)
    x = jax.random.normal(kx, (batch, seq, input_dim), jnp.float32)
    params = init_params(kp, input_dim, hidden_dim, output_dim)

    y = lstm_forward(x, params,
                     input_dim=input_dim, hidden_dim=hidden_dim,
                     output_dim=output_dim)
    y = jax.block_until_ready(y)

    y_ref = lstm_reference(x, params)
    assert y.shape == (batch, output_dim)
    assert jnp.allclose(y, y_ref, atol=1e-5, rtol=1e-5), "mismatch vs reference"
    print("KERNEL_OK")
</pallas_src>

<mosaic_0001>
module attributes {stable_mosaic.version = 11 : i64} {
  func.func @_lstm_kernel(%arg0: memref<64x16xf32, #tpu.memory_space<vmem>>, %arg1: memref<16x128xf32, #tpu.memory_space<vmem>>, %arg2: memref<32x128xf32, #tpu.memory_space<vmem>>, %arg3: memref<1x128xf32, #tpu.memory_space<vmem>>, %arg4: memref<32x10xf32, #tpu.memory_space<vmem>>, %arg5: memref<1x10xf32, #tpu.memory_space<vmem>>, %arg6: memref<8x10xf32, #tpu.memory_space<vmem>>) attributes {dimension_semantics = [], scalar_prefetch = 0 : i64, scratch_operands = 0 : i64, tpu.core_type = #tpu.core_type<tc>} {
    %c0 = arith.constant 0 : index
    %c0_0 = arith.constant 0 : index
    %0 = vector.load %arg0[%c0, %c0_0] : memref<64x16xf32, #tpu.memory_space<vmem>>, vector<64x16xf32>
    %c0_1 = arith.constant 0 : index
    %c0_2 = arith.constant 0 : index
    %1 = vector.load %arg1[%c0_1, %c0_2] : memref<16x128xf32, #tpu.memory_space<vmem>>, vector<16x128xf32>
    %cst = arith.constant dense<0.000000e+00> : vector<64x128xf32>
    %2 = tpu.matmul %0, %1, %cst {dimension_numbers = #tpu.dot_dimension_numbers<[1], [0], [0], [1], [0, 0, 1, 1], [], []>} : vector<64x16xf32>, vector<16x128xf32>, vector<64x128xf32> -> vector<64x128xf32>
    %c0_3 = arith.constant 0 : index
    %c0_4 = arith.constant 0 : index
    %3 = vector.load %arg3[%c0_3, %c0_4] : memref<1x128xf32, #tpu.memory_space<vmem>>, vector<1x128xf32>
    %4 = vector.broadcast %3 : vector<1x128xf32> to vector<64x128xf32>
    %5 = arith.addf %2, %4 : vector<64x128xf32>
    %c0_5 = arith.constant 0 : index
    %c0_6 = arith.constant 0 : index
    %6 = vector.load %arg2[%c0_5, %c0_6] : memref<32x128xf32, #tpu.memory_space<vmem>>, vector<32x128xf32>
    %7 = tpu.iota {dimensions = array<i32: 1>} : vector<8x128xi32>
    %c32_i32 = arith.constant 32 : i32
    %8 = vector.broadcast %c32_i32 : i32 to vector<8x128xi32>
    %9 = arith.cmpi slt, %7, %8 : vector<8x128xi32>
    %cst_7 = arith.constant 1.000000e+00 : f32
    %cst_8 = arith.constant 5.000000e-01 : f32
    %10 = vector.broadcast %cst_7 : f32 to vector<8x128xf32>
    %11 = vector.broadcast %cst_8 : f32 to vector<8x128xf32>
    %12 = arith.select %9, %10, %11 : vector<8x128xi1>, vector<8x128xf32>
    %c32_i32_9 = arith.constant 32 : i32
    %13 = vector.broadcast %c32_i32_9 : i32 to vector<8x128xi32>
    %14 = arith.cmpi slt, %7, %13 : vector<8x128xi32>
    %cst_10 = arith.constant 0.000000e+00 : f32
    %cst_11 = arith.constant 5.000000e-01 : f32
    %15 = vector.broadcast %cst_10 : f32 to vector<8x128xf32>
    %16 = vector.broadcast %cst_11 : f32 to vector<8x128xf32>
    %17 = arith.select %14, %15, %16 : vector<8x128xi1>, vector<8x128xf32>
    %cst_12 = arith.constant 0.000000e+00 : f32
    %18 = vector.broadcast %cst_12 : f32 to vector<8x32xf32>
    %cst_13 = arith.constant 0.000000e+00 : f32
    %19 = vector.broadcast %cst_13 : f32 to vector<8x32xf32>
    %20 = vector.extract_strided_slice %5 {offsets = [0, 0], sizes = [8, 128], strides = [1, 1]} : vector<64x128xf32> to vector<8x128xf32>
    %cst_14 = arith.constant dense<0.000000e+00> : vector<8x128xf32>
    %21 = tpu.matmul %18, %6, %cst_14 {dimension_numbers = #tpu.dot_dimension_numbers<[1], [0], [0], [1], [0, 0, 1, 1], [], []>} : vector<8x32xf32>, vector<32x128xf32>, vector<8x128xf32> -> vector<8x128xf32>
    %22 = arith.addf %20, %21 : vector<8x128xf32>
    %23 = math.tanh %22 : vector<8x128xf32>
    %24 = arith.mulf %12, %23 : vector<8x128xf32>
    %25 = arith.addf %24, %17 : vector<8x128xf32>
    %26 = vector.extract_strided_slice %25 {offsets = [0, 0], sizes = [8, 32], strides = [1, 1]} : vector<8x128xf32> to vector<8x32xf32>
    %27 = vector.extract_strided_slice %25 {offsets = [0, 32], sizes = [8, 32], strides = [1, 1]} : vector<8x128xf32> to vector<8x32xf32>
    %28 = vector.extract_strided_slice %25 {offsets = [0, 64], sizes = [8, 32], strides = [1, 1]} : vector<8x128xf32> to vector<8x32xf32>
    %29 = vector.extract_strided_slice %25 {offsets = [0, 96], sizes = [8, 32], strides = [1, 1]} : vector<8x128xf32> to vector<8x32xf32>
    %30 = arith.mulf %26, %27 : vector<8x32xf32>
    %31 = arith.mulf %19, %28 : vector<8x32xf32>
    %32 = arith.addf %30, %31 : vector<8x32xf32>
    %33 = math.tanh %32 : vector<8x32xf32>
    %34 = arith.mulf %33, %29 : vector<8x32xf32>
    %35 = vector.extract_strided_slice %5 {offsets = [8, 0], sizes = [8, 128], strides = [1, 1]} : vector<64x128xf32> to vector<8x128xf32>
    %cst_15 = arith.constant dense<0.000000e+00> : vector<8x128xf32>
    %36 = tpu.matmul %34, %6, %cst_15 {dimension_numbers = #tpu.dot_dimension_numbers<[1], [0], [0], [1], [0, 0, 1, 1], [], []>} : vector<8x32xf32>, vector<32x128xf32>, vector<8x128xf32> -> vector<8x128xf32>
    %37 = arith.addf %35, %36 : vector<8x128xf32>
    %38 = math.tanh %37 : vector<8x128xf32>
    %39 = arith.mulf %12, %38 : vector<8x128xf32>
    %40 = arith.addf %39, %17 : vector<8x128xf32>
    %41 = vector.extract_strided_slice %40 {offsets = [0, 0], sizes = [8, 32], strides = [1, 1]} : vector<8x128xf32> to vector<8x32xf32>
    %42 = vector.extract_strided_slice %40 {offsets = [0, 32], sizes = [8, 32], strides = [1, 1]} : vector<8x128xf32> to vector<8x32xf32>
    %43 = vector.extract_strided_slice %40 {offsets = [0, 64], sizes = [8, 32], strides = [1, 1]} : vector<8x128xf32> to vector<8x32xf32>
    %44 = vector.extract_strided_slice %40 {offsets = [0, 96], sizes = [8, 32], strides = [1, 1]} : vector<8x128xf32> to vector<8x32xf32>
    %45 = arith.mulf %41, %42 : vector<8x32xf32>
    %46 = arith.mulf %32, %43 : vector<8x32xf32>
    %47 = arith.addf %45, %46 : vector<8x32xf32>
    %48 = math.tanh %47 : vector<8x32xf32>
    %49 = arith.mulf %48, %44 : vector<8x32xf32>
    %50 = vector.extract_strided_slice %5 {offsets = [16, 0], sizes = [8, 128], strides = [1, 1]} : vector<64x128xf32> to vector<8x128xf32>
    %cst_16 = arith.constant dense<0.000000e+00> : vector<8x128xf32>
    %51 = tpu.matmul %49, %6, %cst_16 {dimension_numbers = #tpu.dot_dimension_numbers<[1], [0], [0], [1], [0, 0, 1, 1], [], []>} : vector<8x32xf32>, vector<32x128xf32>, vector<8x128xf32> -> vector<8x128xf32>
    %52 = arith.addf %50, %51 : vector<8x128xf32>
    %53 = math.tanh %52 : vector<8x128xf32>
    %54 = arith.mulf %12, %53 : vector<8x128xf32>
    %55 = arith.addf %54, %17 : vector<8x128xf32>
    %56 = vector.extract_strided_slice %55 {offsets = [0, 0], sizes = [8, 32], strides = [1, 1]} : vector<8x128xf32> to vector<8x32xf32>
    %57 = vector.extract_strided_slice %55 {offsets = [0, 32], sizes = [8, 32], strides = [1, 1]} : vector<8x128xf32> to vector<8x32xf32>
    %58 = vector.extract_strided_slice %55 {offsets = [0, 64], sizes = [8, 32], strides = [1, 1]} : vector<8x128xf32> to vector<8x32xf32>
    %59 = vector.extract_strided_slice %55 {offsets = [0, 96], sizes = [8, 32], strides = [1, 1]} : vector<8x128xf32> to vector<8x32xf32>
    %60 = arith.mulf %56, %57 : vector<8x32xf32>
    %61 = arith.mulf %47, %58 : vector<8x32xf32>
    %62 = arith.addf %60, %61 : vector<8x32xf32>
    %63 = math.tanh %62 : vector<8x32xf32>
    %64 = arith.mulf %63, %59 : vector<8x32xf32>
    %65 = vector.extract_strided_slice %5 {offsets = [24, 0], sizes = [8, 128], strides = [1, 1]} : vector<64x128xf32> to vector<8x128xf32>
    %cst_17 = arith.constant dense<0.000000e+00> : vector<8x128xf32>
    %66 = tpu.matmul %64, %6, %cst_17 {dimension_numbers = #tpu.dot_dimension_numbers<[1], [0], [0], [1], [0, 0, 1, 1], [], []>} : vector<8x32xf32>, vector<32x128xf32>, vector<8x128xf32> -> vector<8x128xf32>
    %67 = arith.addf %65, %66 : vector<8x128xf32>
    %68 = math.tanh %67 : vector<8x128xf32>
    %69 = arith.mulf %12, %68 : vector<8x128xf32>
    %70 = arith.addf %69, %17 : vector<8x128xf32>
    %71 = vector.extract_strided_slice %70 {offsets = [0, 0], sizes = [8, 32], strides = [1, 1]} : vector<8x128xf32> to vector<8x32xf32>
    %72 = vector.extract_strided_slice %70 {offsets = [0, 32], sizes = [8, 32], strides = [1, 1]} : vector<8x128xf32> to vector<8x32xf32>
    %73 = vector.extract_strided_slice %70 {offsets = [0, 64], sizes = [8, 32], strides = [1, 1]} : vector<8x128xf32> to vector<8x32xf32>
    %74 = vector.extract_strided_slice %70 {offsets = [0, 96], sizes = [8, 32], strides = [1, 1]} : vector<8x128xf32> to vector<8x32xf32>
    %75 = arith.mulf %71, %72 : vector<8x32xf32>
    %76 = arith.mulf %62, %73 : vector<8x32xf32>
    %77 = arith.addf %75, %76 : vector<8x32xf32>
    %78 = math.tanh %77 : vector<8x32xf32>
    %79 = arith.mulf %78, %74 : vector<8x32xf32>
    %80 = vector.extract_strided_slice %5 {offsets = [32, 0], sizes = [8, 128], strides = [1, 1]} : vector<64x128xf32> to vector<8x128xf32>
    %cst_18 = arith.constant dense<0.000000e+00> : vector<8x128xf32>
    %81 = tpu.matmul %79, %6, %cst_18 {dimension_numbers = #tpu.dot_dimension_numbers<[1], [0], [0], [1], [0, 0, 1, 1], [], []>} : vector<8x32xf32>, vector<32x128xf32>, vector<8x128xf32> -> vector<8x128xf32>
    %82 = arith.addf %80, %81 : vector<8x128xf32>
    %83 = math.tanh %82 : vector<8x128xf32>
    %84 = arith.mulf %12, %83 : vector<8x128xf32>
    %85 = arith.addf %84, %17 : vector<8x128xf32>
    %86 = vector.extract_strided_slice %85 {offsets = [0, 0], sizes = [8, 32], strides = [1, 1]} : vector<8x128xf32> to vector<8x32xf32>
    %87 = vector.extract_strided_slice %85 {offsets = [0, 32], sizes = [8, 32], strides = [1, 1]} : vector<8x128xf32> to vector<8x32xf32>
    %88 = vector.extract_strided_slice %85 {offsets = [0, 64], sizes = [8, 32], strides = [1, 1]} : vector<8x128xf32> to vector<8x32xf32>
    %89 = vector.extract_strided_slice %85 {offsets = [0, 96], sizes = [8, 32], strides = [1, 1]} : vector<8x128xf32> to vector<8x32xf32>
    %90 = arith.mulf %86, %87 : vector<8x32xf32>
    %91 = arith.mulf %77, %88 : vector<8x32xf32>
    %92 = arith.addf %90, %91 : vector<8x32xf32>
    %93 = math.tanh %92 : vector<8x32xf32>
    %94 = arith.mulf %93, %89 : vector<8x32xf32>
    %95 = vector.extract_strided_slice %5 {offsets = [40, 0], sizes = [8, 128], strides = [1, 1]} : vector<64x128xf32> to vector<8x128xf32>
    %cst_19 = arith.constant dense<0.000000e+00> : vector<8x128xf32>
    %96 = tpu.matmul %94, %6, %cst_19 {dimension_numbers = #tpu.dot_dimension_numbers<[1], [0], [0], [1], [0, 0, 1, 1], [], []>} : vector<8x32xf32>, vector<32x128xf32>, vector<8x128xf32> -> vector<8x128xf32>
    %97 = arith.addf %95, %96 : vector<8x128xf32>
    %98 = math.tanh %97 : vector<8x128xf32>
    %99 = arith.mulf %12, %98 : vector<8x128xf32>
    %100 = arith.addf %99, %17 : vector<8x128xf32>
    %101 = vector.extract_strided_slice %100 {offsets = [0, 0], sizes = [8, 32], strides = [1, 1]} : vector<8x128xf32> to vector<8x32xf32>
    %102 = vector.extract_strided_slice %100 {offsets = [0, 32], sizes = [8, 32], strides = [1, 1]} : vector<8x128xf32> to vector<8x32xf32>
    %103 = vector.extract_strided_slice %100 {offsets = [0, 64], sizes = [8, 32], strides = [1, 1]} : vector<8x128xf32> to vector<8x32xf32>
    %104 = vector.extract_strided_slice %100 {offsets = [0, 96], sizes = [8, 32], strides = [1, 1]} : vector<8x128xf32> to vector<8x32xf32>
    %105 = arith.mulf %101, %102 : vector<8x32xf32>
    %106 = arith.mulf %92, %103 : vector<8x32xf32>
    %107 = arith.addf %105, %106 : vector<8x32xf32>
    %108 = math.tanh %107 : vector<8x32xf32>
    %109 = arith.mulf %108, %104 : vector<8x32xf32>
    %110 = vector.extract_strided_slice %5 {offsets = [48, 0], sizes = [8, 128], strides = [1, 1]} : vector<64x128xf32> to vector<8x128xf32>
    %cst_20 = arith.constant dense<0.000000e+00> : vector<8x128xf32>
    %111 = tpu.matmul %109, %6, %cst_20 {dimension_numbers = #tpu.dot_dimension_numbers<[1], [0], [0], [1], [0, 0, 1, 1], [], []>} : vector<8x32xf32>, vector<32x128xf32>, vector<8x128xf32> -> vector<8x128xf32>
    %112 = arith.addf %110, %111 : vector<8x128xf32>
    %113 = math.tanh %112 : vector<8x128xf32>
    %114 = arith.mulf %12, %113 : vector<8x128xf32>
    %115 = arith.addf %114, %17 : vector<8x128xf32>
    %116 = vector.extract_strided_slice %115 {offsets = [0, 0], sizes = [8, 32], strides = [1, 1]} : vector<8x128xf32> to vector<8x32xf32>
    %117 = vector.extract_strided_slice %115 {offsets = [0, 32], sizes = [8, 32], strides = [1, 1]} : vector<8x128xf32> to vector<8x32xf32>
    %118 = vector.extract_strided_slice %115 {offsets = [0, 64], sizes = [8, 32], strides = [1, 1]} : vector<8x128xf32> to vector<8x32xf32>
    %119 = vector.extract_strided_slice %115 {offsets = [0, 96], sizes = [8, 32], strides = [1, 1]} : vector<8x128xf32> to vector<8x32xf32>
    %120 = arith.mulf %116, %117 : vector<8x32xf32>
    %121 = arith.mulf %107, %118 : vector<8x32xf32>
    %122 = arith.addf %120, %121 : vector<8x32xf32>
    %123 = math.tanh %122 : vector<8x32xf32>
    %124 = arith.mulf %123, %119 : vector<8x32xf32>
    %125 = vector.extract_strided_slice %5 {offsets = [56, 0], sizes = [8, 128], strides = [1, 1]} : vector<64x128xf32> to vector<8x128xf32>
    %cst_21 = arith.constant dense<0.000000e+00> : vector<8x128xf32>
    %126 = tpu.matmul %124, %6, %cst_21 {dimension_numbers = #tpu.dot_dimension_numbers<[1], [0], [0], [1], [0, 0, 1, 1], [], []>} : vector<8x32xf32>, vector<32x128xf32>, vector<8x128xf32> -> vector<8x128xf32>
    %127 = arith.addf %125, %126 : vector<8x128xf32>
    %128 = math.tanh %127 : vector<8x128xf32>
    %129 = arith.mulf %12, %128 : vector<8x128xf32>
    %130 = arith.addf %129, %17 : vector<8x128xf32>
    %131 = vector.extract_strided_slice %130 {offsets = [0, 0], sizes = [8, 32], strides = [1, 1]} : vector<8x128xf32> to vector<8x32xf32>
    %132 = vector.extract_strided_slice %130 {offsets = [0, 32], sizes = [8, 32], strides = [1, 1]} : vector<8x128xf32> to vector<8x32xf32>
    %133 = vector.extract_strided_slice %130 {offsets = [0, 64], sizes = [8, 32], strides = [1, 1]} : vector<8x128xf32> to vector<8x32xf32>
    %134 = vector.extract_strided_slice %130 {offsets = [0, 96], sizes = [8, 32], strides = [1, 1]} : vector<8x128xf32> to vector<8x32xf32>
    %135 = arith.mulf %131, %132 : vector<8x32xf32>
    %136 = arith.mulf %122, %133 : vector<8x32xf32>
    %137 = arith.addf %135, %136 : vector<8x32xf32>
    %138 = math.tanh %137 : vector<8x32xf32>
    %139 = arith.mulf %138, %134 : vector<8x32xf32>
    %c0_22 = arith.constant 0 : index
    %c0_23 = arith.constant 0 : index
    %140 = vector.load %arg4[%c0_22, %c0_23] : memref<32x10xf32, #tpu.memory_space<vmem>>, vector<32x10xf32>
    %cst_24 = arith.constant dense<0.000000e+00> : vector<8x10xf32>
    %141 = tpu.matmul %139, %140, %cst_24 {dimension_numbers = #tpu.dot_dimension_numbers<[1], [0], [0], [1], [0, 0, 1, 1], [], []>} : vector<8x32xf32>, vector<32x10xf32>, vector<8x10xf32> -> vector<8x10xf32>
    %c0_25 = arith.constant 0 : index
    %c0_26 = arith.constant 0 : index
    %142 = vector.load %arg5[%c0_25, %c0_26] : memref<1x10xf32, #tpu.memory_space<vmem>>, vector<1x10xf32>
    %143 = vector.broadcast %142 : vector<1x10xf32> to vector<8x10xf32>
    %144 = arith.addf %141, %143 : vector<8x10xf32>
    %cst_27 = arith.constant dense<0xFF800000> : vector<8xf32>
    %145 = vector.multi_reduction <maximumf>, %144, %cst_27 [1] : vector<8x10xf32> to vector<8xf32>
    %146 = vector.shape_cast %145 : vector<8xf32> to vector<8x1xf32>
    %147 = vector.broadcast %146 : vector<8x1xf32> to vector<8x10xf32>
    %148 = arith.subf %144, %147 : vector<8x10xf32>
    %149 = math.exp %148 : vector<8x10xf32>
    %cst_28 = arith.constant dense<0.000000e+00> : vector<8xf32>
    %150 = vector.multi_reduction <add>, %149, %cst_28 [1] : vector<8x10xf32> to vector<8xf32>
    %151 = vector.shape_cast %150 : vector<8xf32> to vector<8x1xf32>
    %152 = vector.broadcast %151 : vector<8x1xf32> to vector<8x10xf32>
    %153 = arith.divf %149, %152 : vector<8x10xf32>
    %c0_29 = arith.constant 0 : index
    %c0_30 = arith.constant 0 : index
    %154 = vector.load %arg6[%c0_29, %c0_30] : memref<8x10xf32, #tpu.memory_space<vmem>>, vector<8x10xf32>
    tpu.vector_store %arg6[%c0_29, %c0_30], %153 {strides = array<i32>} : memref<8x10xf32, #tpu.memory_space<vmem>>, vector<8x10xf32>,
    return
  }
}

</mosaic_0001>

<llo_original>
// kernel: lstm_forward.1
$region0: #{lstm_forward.1}
  #allocation0 [shape = 'u32[]', space=smem, size = 0x4, offset = 0x4, fixed_abs, tag = 'smem constant byte address 0x4 - core index']
  #allocation1 [shape = 'u32[144,128]{1,0:T(1,128)}', space=vmem, size = 0x12000, scoped, tag = 'internal scratch']
  %s0 = inlined_call_operand.vmem [shape: f32[64,16], index: 0, kind: input, shape index: {}]
  %s1 = inlined_call_operand.vmem [shape: f32[16,128], index: 1, kind: input, shape index: {}]
  %s2 = inlined_call_operand.vmem [shape: f32[32,128], index: 2, kind: input, shape index: {}]
  %s3 = inlined_call_operand.vmem [shape: f32[1,128], index: 3, kind: input, shape index: {}]
  %s4 = inlined_call_operand.vmem [shape: f32[32,10], index: 4, kind: input, shape index: {}]
  %s5 = inlined_call_operand.vmem [shape: f32[1,10], index: 5, kind: input, shape index: {}]
  %s6 = inlined_call_operand.hbm [shape: f32[8,10], index: 6, kind: output, shape index: {}]
  %s7 = sld [smem:[#allocation0]]
  $region34: #{lstm_forward.1} parent=0
    _
  %s9 = ssub.s32 1, %s7
  %s10 = scalar_select 0, %s9, %s7
  $region1: #{lstm_forward.1} parent=0
    #allocation2 [shape = 'u8[4096]{0}', space=vmem, size = 0x1000, scoped, tag = 'output window, operand 0, single buffered']
    #allocation3 [shape = 's32[1]{0}', space=sflag, size = 0x4, scoped, tag = 'scoped memory for lstm_forward.1']
    %11 = vsyncpa [#allocation3], 0
    // Predicated region
    $region2: #{lstm_forward.1} parent=1 // pred_check
      _
    $region3: #{lstm_forward.1} parent=1 // pred_check_branch
      %13 = sbr.rel (0) target = $region5
    $region4: #{lstm_forward.1} parent=1 // pred_region
      _
    $region5: #{lstm_forward.1} parent=1 // pred_fallthru
      _
    // Predicated region
    $region6: #{lstm_forward.1} parent=1 // pred_check
      _
    $region7: #{lstm_forward.1} parent=1 // pred_check_branch
      %15 = sbr.rel (0) target = $region9
    $region8: #{lstm_forward.1} parent=1 // pred_region
      _
    $region9: #{lstm_forward.1} parent=1 // pred_fallthru
      _
    // Predicated region
    $region10: #{lstm_forward.1} parent=1 // pred_check
      _
    $region11: #{lstm_forward.1} parent=1 // pred_check_branch
      %17 = sbr.rel (0) target = $region13
    $region12: #{lstm_forward.1} parent=1 // pred_region
      _
    $region13: #{lstm_forward.1} parent=1 // pred_fallthru
      _
    // Predicated region
    $region14: #{lstm_forward.1} parent=1 // pred_check
      _
    $region15: #{lstm_forward.1} parent=1 // pred_check_branch
      %19 = sbr.rel (0) target = $region17
    $region16: #{lstm_forward.1} parent=1 // pred_region
      _
    $region17: #{lstm_forward.1} parent=1 // pred_fallthru
      _
    // Predicated region
    $region18: #{lstm_forward.1} parent=1 // pred_check
      _
    $region19: #{lstm_forward.1} parent=1 // pred_check_branch
      %21 = sbr.rel (0) target = $region21
    $region20: #{lstm_forward.1} parent=1 // pred_region
      _
    $region21: #{lstm_forward.1} parent=1 // pred_fallthru
      _
    // Predicated region
    $region22: #{lstm_forward.1} parent=1 // pred_check
      _
    $region23: #{lstm_forward.1} parent=1 // pred_check_branch
      %23 = sbr.rel (0) target = $region25
    $region24: #{lstm_forward.1} parent=1 // pred_region
      _
    $region25: #{lstm_forward.1} parent=1 // pred_fallthru
      _
    %v24 = vld [vmem:[%s0] sm:$0xff]
    %v25 = vld [vmem:[%s0 + $0x8] sm:$0xff]
    %v26 = vld [vmem:[%s0 + $0x10] sm:$0xff]
    %v27 = vld [vmem:[%s0 + $0x18] sm:$0xff]
    %v28 = vld [vmem:[%s0 + $0x20] sm:$0xff]
    %v29 = vld [vmem:[%s0 + $0x28] sm:$0xff]
    %v30 = vld [vmem:[%s0 + $0x30] sm:$0xff]
    %v31 = vld [vmem:[%s0 + $0x38] sm:$0xff]
    %v32 = vld [vmem:[%s1] sm:$0xff]
    %v33 = vld [vmem:[%s1 + $0x8] sm:$0xff]
    %v34 = vld [vmem:[%s3] sm:$0x1]
    %v36 = vlaneseq
    %v37 = vshrl.u32 %v36, 7
    %v38 = vsub.s32 0, %v37
    %v39 = vrot.slane %v34, %v38
    %vm41 = vcmask 130048
    %v43 = vsel %vm41, %v24, 0
    %v46 = vsel %vm41, %v25, 0
    %v49 = vsel %vm41, %v26, 0
    %v52 = vsel %vm41, %v27, 0
    %v55 = vsel %vm41, %v28, 0
    %v58 = vsel %vm41, %v29, 0
    %v61 = vsel %vm41, %v30, 0
    %v64 = vsel %vm41, %v31, 0
    %66 = vmatprep.subr.mxu0 0.0
    %67 = vmatpush1.msra.mxu0 0.0
    %68 = vmatprep.subr.mxu0 0.0
    %69 = vmatpush1.msra.mxu0 0.0
    %70 = vmatprep.subr.mxu0 0.0
    %71 = vmatpush1.msra.mxu0 0.0
    %72 = vmatprep.subr.mxu0 0.0
    %73 = vmatpush1.msra.mxu0 0.0
    %74 = vmatprep.subr.mxu0 0.0
    %75 = vmatpush1.msra.mxu0 0.0
    %76 = vmatprep.subr.mxu0 0.0
    %77 = vmatpush1.msra.mxu0 0.0
    %78 = vmatprep.subr.mxu0 0.0
    %79 = vmatpush1.msra.mxu0 0.0
    %80 = vmatprep.subr.mxu0 0.0
    %81 = vmatpush1.msra.mxu0 0.0
    %82 = vmatprep.subr.mxu0 0.0
    %83 = vmatpush1.msra.mxu0 0.0
    %84 = vmatprep.subr.mxu0 0.0
    %85 = vmatpush1.msra.mxu0 0.0
    %86 = vmatprep.subr.mxu0 0.0
    %87 = vmatpush1.msra.mxu0 0.0
    %88 = vmatprep.subr.mxu0 0.0
    %89 = vmatpush1.msra.mxu0 0.0
    %90 = vmatprep.subr.mxu0 0.0
    %91 = vmatpush1.msra.mxu0 0.0
    %92 = vmatprep.subr.mxu0 0.0
    %93 = vmatpush1.msra.mxu0 0.0
    %94 = vmatprep.subr.mxu0 0.0
    %95 = vmatpush1.msra.mxu0 %v33
    %96 = vmatprep.subr.mxu0 0.0
    %97 = vmatpush1.msra.mxu0 %v32
    %98 = vmatprep.subr.mxu0 0.0
    %99 = vmatpush2.msra.mxu0 0.0
    %100 = vmatprep.subr.mxu0 0.0
    %101 = vmatpush2.msra.mxu0 0.0
    %102 = vmatprep.subr.mxu0 0.0
    %103 = vmatpush2.msra.mxu0 0.0
    %104 = vmatprep.subr.mxu0 0.0
    %105 = vmatpush2.msra.mxu0 0.0
    %106 = vmatprep.subr.mxu0 0.0
    %107 = vmatpush2.msra.mxu0 0.0
    %108 = vmatprep.subr.mxu0 0.0
    %109 = vmatpush2.msra.mxu0 0.0
    %110 = vmatprep.subr.mxu0 0.0
    %111 = vmatpush2.msra.mxu0 0.0
    %112 = vmatprep.subr.mxu0 0.0
    %113 = vmatpush2.msra.mxu0 0.0
    %114 = vmatprep.subr.mxu0 0.0
    %115 = vmatpush2.msra.mxu0 0.0
    %116 = vmatprep.subr.mxu0 0.0
    %117 = vmatpush2.msra.mxu0 0.0
    %118 = vmatprep.subr.mxu0 0.0
    %119 = vmatpush2.msra.mxu0 0.0
    %120 = vmatprep.subr.mxu0 0.0
    %121 = vmatpush2.msra.mxu0 0.0
    %122 = vmatprep.subr.mxu0 0.0
    %123 = vmatpush2.msra.mxu0 0.0
    %124 = vmatprep.subr.mxu0 0.0
    %125 = vmatpush2.msra.mxu0 0.0
    %126 = vmatprep.subr.mxu0 0.0
    %127 = vmatpush2.msra.mxu0 0.0
    %128 = vmatprep.subr.mxu0 0.0
    %129 = vmatpush2.msra.mxu0 0.0
    %130 = vmatprep.mubr.f32.mxu0 0.0
    %131 = vmatmul.mubr.f32.gmra.mxu0 %v43
    %v132 = vpop.f32.mrf.mxu0
    %v133 = vadd.f32 %v39, %v132
    %v134 = vpop.f32.mrf.mxu0
    %135 = vmatprep.mubr.f32.mxu0 0.0
    %136 = vmatmul.mubr.f32.gmra.mxu0 %v46
    %v137 = vpop.f32.mrf.mxu0
    %v138 = vadd.f32 %v39, %v137
    %v139 = vpop.f32.mrf.mxu0
    %140 = vmatprep.mubr.f32.mxu0 0.0
    %141 = vmatmul.mubr.f32.gmra.mxu0 %v49
    %v142 = vpop.f32.mrf.mxu0
    %v143 = vadd.f32 %v39, %v142
    %v144 = vpop.f32.mrf.mxu0
    %145 = vmatprep.mubr.f32.mxu0 0.0
    %146 = vmatmul.mubr.f32.gmra.mxu0 %v52
    %v147 = vpop.f32.mrf.mxu0
    %v148 = vadd.f32 %v39, %v147
    %v149 = vpop.f32.mrf.mxu0
    %150 = vmatprep.mubr.f32.mxu0 0.0
    %151 = vmatmul.mubr.f32.gmra.mxu0 %v55
    %v152 = vpop.f32.mrf.mxu0
    %v153 = vadd.f32 %v39, %v152
    %v154 = vpop.f32.mrf.mxu0
    %155 = vmatprep.mubr.f32.mxu0 0.0
    %156 = vmatmul.mubr.f32.gmra.mxu0 %v58
    %v157 = vpop.f32.mrf.mxu0
    %v158 = vadd.f32 %v39, %v157
    %v159 = vpop.f32.mrf.mxu0
    %160 = vmatprep.mubr.f32.mxu0 0.0
    %161 = vmatmul.mubr.f32.gmra.mxu0 %v61
    %v162 = vpop.f32.mrf.mxu0
    %v163 = vadd.f32 %v39, %v162
    %v164 = vpop.f32.mrf.mxu0
    %165 = vmatprep.mubr.f32.mxu0 0.0
    %166 = vmatmul.mubr.f32.gmra.mxu0 %v64
    %v167 = vpop.f32.mrf.mxu0
    %v168 = vadd.f32 %v39, %v167
    %v169 = vpop.f32.mrf.mxu0
    %170 = vdwg.mxu0
    %v171 = vld [vmem:[%s2] sm:$0xff]
    %v172 = vld [vmem:[%s2 + $0x8] sm:$0xff]
    %v173 = vld [vmem:[%s2 + $0x10] sm:$0xff]
    %v174 = vld [vmem:[%s2 + $0x18] sm:$0xff]
    %v175 = vlaneseq
    %v176 = vand.u32 %v175, 127
    %vm177 = vcmp.lt.s32.totalorder %v176, 32
    %v178 = vsel %vm177, 1.0, 0.5
    %v179 = vsel %vm177, 0.0, 0.5
    %vm180 = vcmask 261120
    %v182 = vsel %vm180, 0.0, 0
    %184 = vmatprep.subr.mxu0 0.0
    %185 = vmatpush1.msra.mxu0 0.0
    %186 = vmatprep.subr.mxu0 0.0
    %187 = vmatpush1.msra.mxu0 0.0
    %188 = vmatprep.subr.mxu0 0.0
    %189 = vmatpush1.msra.mxu0 0.0
    %190 = vmatprep.subr.mxu0 0.0
    %191 = vmatpush1.msra.mxu0 0.0
    %192 = vmatprep.subr.mxu0 0.0
    %193 = vmatpush1.msra.mxu0 0.0
    %194 = vmatprep.subr.mxu0 0.0
    %195 = vmatpush1.msra.mxu0 0.0
    %196 = vmatprep.subr.mxu0 0.0
    %197 = vmatpush1.msra.mxu0 0.0
    %198 = vmatprep.subr.mxu0 0.0
    %199 = vmatpush1.msra.mxu0 0.0
    %200 = vmatprep.subr.mxu0 0.0
    %201 = vmatpush1.msra.mxu0 0.0
    %202 = vmatprep.subr.mxu0 0.0
    %203 = vmatpush1.msra.mxu0 0.0
    %204 = vmatprep.subr.mxu0 0.0
    %205 = vmatpush1.msra.mxu0 0.0
    %206 = vmatprep.subr.mxu0 0.0
    %207 = vmatpush1.msra.mxu0 0.0
    %208 = vmatprep.subr.mxu0 0.0
    %209 = vmatpush1.msra.mxu0 %v174
    %210 = vmatprep.subr.mxu0 0.0
    %211 = vmatpush1.msra.mxu0 %v173
    %212 = vmatprep.subr.mxu0 0.0
    %213 = vmatpush1.msra.mxu0 %v172
    %214 = vmatprep.subr.mxu0 0.0
    %215 = vmatpush1.msra.mxu0 %v171
    %216 = vmatprep.subr.mxu0 0.0
    %217 = vmatpush2.msra.mxu0 0.0
    %218 = vmatprep.subr.mxu0 0.0
    %219 = vmatpush2.msra.mxu0 0.0
    %220 = vmatprep.subr.mxu0 0.0
    %221 = vmatpush2.msra.mxu0 0.0
    %222 = vmatprep.subr.mxu0 0.0
    %223 = vmatpush2.msra.mxu0 0.0
    %224 = vmatprep.subr.mxu0 0.0
    %225 = vmatpush2.msra.mxu0 0.0
    %226 = vmatprep.subr.mxu0 0.0
    %227 = vmatpush2.msra.mxu0 0.0
    %228 = vmatprep.subr.mxu0 0.0
    %229 = vmatpush2.msra.mxu0 0.0
    %230 = vmatprep.subr.mxu0 0.0
    %231 = vmatpush2.msra.mxu0 0.0
    %232 = vmatprep.subr.mxu0 0.0
    %233 = vmatpush2.msra.mxu0 0.0
    %234 = vmatprep.subr.mxu0 0.0
    %235 = vmatpush2.msra.mxu0 0.0
    %236 = vmatprep.subr.mxu0 0.0
    %237 = vmatpush2.msra.mxu0 0.0
    %238 = vmatprep.subr.mxu0 0.0
    %239 = vmatpush2.msra.mxu0 0.0
    %240 = vmatprep.subr.mxu0 0.0
    %241 = vmatpush2.msra.mxu0 0.0
    %242 = vmatprep.subr.mxu0 0.0
    %243 = vmatpush2.msra.mxu0 0.0
    %244 = vmatprep.subr.mxu0 0.0
    %245 = vmatpush2.msra.mxu0 0.0
    %246 = vmatprep.subr.mxu0 0.0
    %247 = vmatpush2.msra.mxu0 0.0
    %248 = vmatprep.mubr.f32.mxu0 0.0
    %249 = vmatmul.mubr.f32.gmra.mxu0 %v182
    %v250 = vpop.f32.mrf.mxu0
    %v251 = vadd.f32 0.0, %v250
    %v252 = vpop.f32.mrf.mxu0
    %253 = vdwg.mxu0
    %v254 = vadd.f32 %v133, %v251
    %v255 = vtanh.pop %v254
    %v256 = vmul.f32 %v178, %v255
    %v257 = vadd.f32 %v256, %v179
    %259 = vrot.lane.b32.xlu0 %v257, 96
    %v260 = vpop.permute.xlu0 %259
    %v262 = vmul.f32 %v257, %v260
    %v263 = vmul.f32 %v257, 0.0
    %265 = vrot.lane.b32.xlu0 %v263, 64
    %v266 = vpop.permute.xlu0 %265
    %v268 = vadd.f32 %v262, %v266
    %v269 = vtanh.pop %v268
    %270 = vrot.lane.b32.xlu0 %v257, 32
    %v271 = vpop.permute.xlu0 %270
    %v273 = vmul.f32 %v269, %v271
    %v275 = vsel %vm180, %v273, 0
    %277 = vmatprep.subr.mxu0 0.0
    %278 = vmatpush1.msra.mxu0 0.0
    %279 = vmatprep.subr.mxu0 0.0
    %280 = vmatpush1.msra.mxu0 0.0
    %281 = vmatprep.subr.mxu0 0.0
    %282 = vmatpush1.msra.mxu0 0.0
    %283 = vmatprep.subr.mxu0 0.0
    %284 = vmatpush1.msra.mxu0 0.0
    %285 = vmatprep.subr.mxu0 0.0
    %286 = vmatpush1.msra.mxu0 0.0
    %287 = vmatprep.subr.mxu0 0.0
    %288 = vmatpush1.msra.mxu0 0.0
    %289 = vmatprep.subr.mxu0 0.0
    %290 = vmatpush1.msra.mxu0 0.0
    %291 = vmatprep.subr.mxu0 0.0
    %292 = vmatpush1.msra.mxu0 0.0
    %293 = vmatprep.subr.mxu0 0.0
    %294 = vmatpush1.msra.mxu0 0.0
    %295 = vmatprep.subr.mxu0 0.0
    %296 = vmatpush1.msra.mxu0 0.0
    %297 = vmatprep.subr.mxu0 0.0
    %298 = vmatpush1.msra.mxu0 0.0
    %299 = vmatprep.subr.mxu0 0.0
    %300 = vmatpush1.msra.mxu0 0.0
    %301 = vmatprep.subr.mxu0 0.0
    %302 = vmatpush1.msra.mxu0 %v174
    %303 = vmatprep.subr.mxu0 0.0
    %304 = vmatpush1.msra.mxu0 %v173
    %305 = vmatprep.subr.mxu0 0.0
    %306 = vmatpush1.msra.mxu0 %v172
    %307 = vmatprep.subr.mxu0 0.0
    %308 = vmatpush1.msra.mxu0 %v171
    %309 = vmatprep.subr.mxu0 0.0
    %310 = vmatpush2.msra.mxu0 0.0
    %311 = vmatprep.subr.mxu0 0.0
    %312 = vmatpush2.msra.mxu0 0.0
    %313 = vmatprep.subr.mxu0 0.0
    %314 = vmatpush2.msra.mxu0 0.0
    %315 = vmatprep.subr.mxu0 0.0
    %316 = vmatpush2.msra.mxu0 0.0
    %317 = vmatprep.subr.mxu0 0.0
    %318 = vmatpush2.msra.mxu0 0.0
    %319 = vmatprep.subr.mxu0 0.0
    %320 = vmatpush2.msra.mxu0 0.0
    %321 = vmatprep.subr.mxu0 0.0
    %322 = vmatpush2.msra.mxu0 0.0
    %323 = vmatprep.subr.mxu0 0.0
    %324 = vmatpush2.msra.mxu0 0.0
    %325 = vmatprep.subr.mxu0 0.0
    %326 = vmatpush2.msra.mxu0 0.0
    %327 = vmatprep.subr.mxu0 0.0
    %328 = vmatpush2.msra.mxu0 0.0
    %329 = vmatprep.subr.mxu0 0.0
    %330 = vmatpush2.msra.mxu0 0.0
    %331 = vmatprep.subr.mxu0 0.0
    %332 = vmatpush2.msra.mxu0 0.0
    %333 = vmatprep.subr.mxu0 0.0
    %334 = vmatpush2.msra.mxu0 0.0
    %335 = vmatprep.subr.mxu0 0.0
    %336 = vmatpush2.msra.mxu0 0.0
    %337 = vmatprep.subr.mxu0 0.0
    %338 = vmatpush2.msra.mxu0 0.0
    %339 = vmatprep.subr.mxu0 0.0
    %340 = vmatpush2.msra.mxu0 0.0
    %341 = vmatprep.mubr.f32.mxu0 0.0
    %342 = vmatmul.mubr.f32.gmra.mxu0 %v275
    %v343 = vpop.f32.mrf.mxu0
    %v344 = vadd.f32 0.0, %v343
    %v345 = vpop.f32.mrf.mxu0
    %346 = vdwg.mxu0
    %v347 = vadd.f32 %v138, %v344
    %v348 = vtanh.pop %v347
    %v349 = vmul.f32 %v178, %v348
    %v350 = vadd.f32 %v349, %v179
    %352 = vrot.lane.b32.xlu0 %v350, 96
    %v353 = vpop.permute.xlu0 %352
    %v355 = vmul.f32 %v350, %v353
    %356 = vrot.lane.b32.xlu0 %v350, 64
    %v357 = vpop.permute.xlu0 %356
    %v359 = vmul.f32 %v268, %v357
    %v360 = vadd.f32 %v355, %v359
    %v361 = vtanh.pop %v360
    %362 = vrot.lane.b32.xlu0 %v350, 32
    %v363 = vpop.permute.xlu0 %362
    %v365 = vmul.f32 %v361, %v363
    %v367 = vsel %vm180, %v365, 0
    %369 = vmatprep.subr.mxu0 0.0
    %370 = vmatpush1.msra.mxu0 0.0
    %371 = vmatprep.subr.mxu0 0.0
    %372 = vmatpush1.msra.mxu0 0.0
    %373 = vmatprep.subr.mxu0 0.0
    %374 = vmatpush1.msra.mxu0 0.0
    %375 = vmatprep.subr.mxu0 0.0
    %376 = vmatpush1.msra.mxu0 0.0
    %377 = vmatprep.subr.mxu0 0.0
    %378 = vmatpush1.msra.mxu0 0.0
    %379 = vmatprep.subr.mxu0 0.0
    %380 = vmatpush1.msra.mxu0 0.0
    %381 = vmatprep.subr.mxu0 0.0
    %382 = vmatpush1.msra.mxu0 0.0
    %383 = vmatprep.subr.mxu0 0.0
    %384 = vmatpush1.msra.mxu0 0.0
    %385 = vmatprep.subr.mxu0 0.0
    %386 = vmatpush1.msra.mxu0 0.0
    %387 = vmatprep.subr.mxu0 0.0
    %388 = vmatpush1.msra.mxu0 0.0
    %389 = vmatprep.subr.mxu0 0.0
    %390 = vmatpush1.msra.mxu0 0.0
    %391 = vmatprep.subr.mxu0 0.0
    %392 = vmatpush1.msra.mxu0 0.0
    %393 = vmatprep.subr.mxu0 0.0
    %394 = vmatpush1.msra.mxu0 %v174
    %395 = vmatprep.subr.mxu0 0.0
    %396 = vmatpush1.msra.mxu0 %v173
    %397 = vmatprep.subr.mxu0 0.0
    %398 = vmatpush1.msra.mxu0 %v172
    %399 = vmatprep.subr.mxu0 0.0
    %400 = vmatpush1.msra.mxu0 %v171
    %401 = vmatprep.subr.mxu0 0.0
    %402 = vmatpush2.msra.mxu0 0.0
    %403 = vmatprep.subr.mxu0 0.0
    %404 = vmatpush2.msra.mxu0 0.0
    %405 = vmatprep.subr.mxu0 0.0
    %406 = vmatpush2.msra.mxu0 0.0
    %407 = vmatprep.subr.mxu0 0.0
    %408 = vmatpush2.msra.mxu0 0.0
    %409 = vmatprep.subr.mxu0 0.0
    %410 = vmatpush2.msra.mxu0 0.0
    %411 = vmatprep.subr.mxu0 0.0
    %412 = vmatpush2.msra.mxu0 0.0
    %413 = vmatprep.subr.mxu0 0.0
    %414 = vmatpush2.msra.mxu0 0.0
    %415 = vmatprep.subr.mxu0 0.0
    %416 = vmatpush2.msra.mxu0 0.0
    %417 = vmatprep.subr.mxu0 0.0
    %418 = vmatpush2.msra.mxu0 0.0
    %419 = vmatprep.subr.mxu0 0.0
    %420 = vmatpush2.msra.mxu0 0.0
    %421 = vmatprep.subr.mxu0 0.0
    %422 = vmatpush2.msra.mxu0 0.0
    %423 = vmatprep.subr.mxu0 0.0
    %424 = vmatpush2.msra.mxu0 0.0
    %425 = vmatprep.subr.mxu0 0.0
    %426 = vmatpush2.msra.mxu0 0.0
    %427 = vmatprep.subr.mxu0 0.0
    %428 = vmatpush2.msra.mxu0 0.0
    %429 = vmatprep.subr.mxu0 0.0
    %430 = vmatpush2.msra.mxu0 0.0
    %431 = vmatprep.subr.mxu0 0.0
    %432 = vmatpush2.msra.mxu0 0.0
    %433 = vmatprep.mubr.f32.mxu0 0.0
    %434 = vmatmul.mubr.f32.gmra.mxu0 %v367
    %v435 = vpop.f32.mrf.mxu0
    %v436 = vadd.f32 0.0, %v435
    %v437 = vpop.f32.mrf.mxu0
    %438 = vdwg.mxu0
    %v439 = vadd.f32 %v143, %v436
    %v440 = vtanh.pop %v439
    %v441 = vmul.f32 %v178, %v440
    %v442 = vadd.f32 %v441, %v179
    %444 = vrot.lane.b32.xlu0 %v442, 96
    %v445 = vpop.permute.xlu0 %444
    %v447 = vmul.f32 %v442, %v445
    %448 = vrot.lane.b32.xlu0 %v442, 64
    %v449 = vpop.permute.xlu0 %448
    %v451 = vmul.f32 %v360, %v449
    %v452 = vadd.f32 %v447, %v451
    %v453 = vtanh.pop %v452
    %454 = vrot.lane.b32.xlu0 %v442, 32
    %v455 = vpop.permute.xlu0 %454
    %v457 = vmul.f32 %v453, %v455
    %v459 = vsel %vm180, %v457, 0
    %461 = vmatprep.subr.mxu0 0.0
    %462 = vmatpush1.msra.mxu0 0.0
    %463 = vmatprep.subr.mxu0 0.0
    %464 = vmatpush1.msra.mxu0 0.0
    %465 = vmatprep.subr.mxu0 0.0
    %466 = vmatpush1.msra.mxu0 0.0
    %467 = vmatprep.subr.mxu0 0.0
    %468 = vmatpush1.msra.mxu0 0.0
    %469 = vmatprep.subr.mxu0 0.0
    %470 = vmatpush1.msra.mxu0 0.0
    %471 = vmatprep.subr.mxu0 0.0
    %472 = vmatpush1.msra.mxu0 0.0
    %473 = vmatprep.subr.mxu0 0.0
    %474 = vmatpush1.msra.mxu0 0.0
    %475 = vmatprep.subr.mxu0 0.0
    %476 = vmatpush1.msra.mxu0 0.0
    %477 = vmatprep.subr.mxu0 0.0
    %478 = vmatpush1.msra.mxu0 0.0
    %479 = vmatprep.subr.mxu0 0.0
    %480 = vmatpush1.msra.mxu0 0.0
    %481 = vmatprep.subr.mxu0 0.0
    %482 = vmatpush1.msra.mxu0 0.0
    %483 = vmatprep.subr.mxu0 0.0
    %484 = vmatpush1.msra.mxu0 0.0
    %485 = vmatprep.subr.mxu0 0.0
    %486 = vmatpush1.msra.mxu0 %v174
    %487 = vmatprep.subr.mxu0 0.0
    %488 = vmatpush1.msra.mxu0 %v173
    %489 = vmatprep.subr.mxu0 0.0
    %490 = vmatpush1.msra.mxu0 %v172
    %491 = vmatprep.subr.mxu0 0.0
    %492 = vmatpush1.msra.mxu0 %v171
    %493 = vmatprep.subr.mxu0 0.0
    %494 = vmatpush2.msra.mxu0 0.0
    %495 = vmatprep.subr.mxu0 0.0
    %496 = vmatpush2.msra.mxu0 0.0
    %497 = vmatprep.subr.mxu0 0.0
    %498 = vmatpush2.msra.mxu0 0.0
    %499 = vmatprep.subr.mxu0 0.0
    %500 = vmatpush2.msra.mxu0 0.0
    %501 = vmatprep.subr.mxu0 0.0
    %502 = vmatpush2.msra.mxu0 0.0
    %503 = vmatprep.subr.mxu0 0.0
    %504 = vmatpush2.msra.mxu0 0.0
    %505 = vmatprep.subr.mxu0 0.0
    %506 = vmatpush2.msra.mxu0 0.0
    %507 = vmatprep.subr.mxu0 0.0
    %508 = vmatpush2.msra.mxu0 0.0
    %509 = vmatprep.subr.mxu0 0.0
    %510 = vmatpush2.msra.mxu0 0.0
    %511 = vmatprep.subr.mxu0 0.0
    %512 = vmatpush2.msra.mxu0 0.0
    %513 = vmatprep.subr.mxu0 0.0
    %514 = vmatpush2.msra.mxu0 0.0
    %515 = vmatprep.subr.mxu0 0.0
    %516 = vmatpush2.msra.mxu0 0.0
    %517 = vmatprep.subr.mxu0 0.0
    %518 = vmatpush2.msra.mxu0 0.0
    %519 = vmatprep.subr.mxu0 0.0
    %520 = vmatpush2.msra.mxu0 0.0
    %521 = vmatprep.subr.mxu0 0.0
    %522 = vmatpush2.msra.mxu0 0.0
    %523 = vmatprep.subr.mxu0 0.0
    %524 = vmatpush2.msra.mxu0 0.0
    %525 = vmatprep.mubr.f32.mxu0 0.0
    %526 = vmatmul.mubr.f32.gmra.mxu0 %v459
    %v527 = vpop.f32.mrf.mxu0
    %v528 = vadd.f32 0.0, %v527
    %v529 = vpop.f32.mrf.mxu0
    %530 = vdwg.mxu0
    %v531 = vadd.f32 %v148, %v528
    %v532 = vtanh.pop %v531
    %v533 = vmul.f32 %v178, %v532
    %v534 = vadd.f32 %v533, %v179
    %536 = vrot.lane.b32.xlu0 %v534, 96
    %v537 = vpop.permute.xlu0 %536
    %v539 = vmul.f32 %v534, %v537
    %540 = vrot.lane.b32.xlu0 %v534, 64
    %v541 = vpop.permute.xlu0 %540
    %v543 = vmul.f32 %v452, %v541
    %v544 = vadd.f32 %v539, %v543
    %v545 = vtanh.pop %v544
    %546 = vrot.lane.b32.xlu0 %v534, 32
    %v547 = vpop.permute.xlu0 %546
    %v549 = vmul.f32 %v545, %v547
    %v551 = vsel %vm180, %v549, 0
    %553 = vmatprep.subr.mxu0 0.0
    %554 = vmatpush1.msra.mxu0 0.0
    %555 = vmatprep.subr.mxu0 0.0
    %556 = vmatpush1.msra.mxu0 0.0
    %557 = vmatprep.subr.mxu0 0.0
    %558 = vmatpush1.msra.mxu0 0.0
    %559 = vmatprep.subr.mxu0 0.0
    %560 = vmatpush1.msra.mxu0 0.0
    %561 = vmatprep.subr.mxu0 0.0
    %562 = vmatpush1.msra.mxu0 0.0
    %563 = vmatprep.subr.mxu0 0.0
    %564 = vmatpush1.msra.mxu0 0.0
    %565 = vmatprep.subr.mxu0 0.0
    %566 = vmatpush1.msra.mxu0 0.0
    %567 = vmatprep.subr.mxu0 0.0
    %568 = vmatpush1.msra.mxu0 0.0
    %569 = vmatprep.subr.mxu0 0.0
    %570 = vmatpush1.msra.mxu0 0.0
    %571 = vmatprep.subr.mxu0 0.0
    %572 = vmatpush1.msra.mxu0 0.0
    %573 = vmatprep.subr.mxu0 0.0
    %574 = vmatpush1.msra.mxu0 0.0
    %575 = vmatprep.subr.mxu0 0.0
    %576 = vmatpush1.msra.mxu0 0.0
    %577 = vmatprep.subr.mxu0 0.0
    %578 = vmatpush1.msra.mxu0 %v174
    %579 = vmatprep.subr.mxu0 0.0
    %580 = vmatpush1.msra.mxu0 %v173
    %581 = vmatprep.subr.mxu0 0.0
    %582 = vmatpush1.msra.mxu0 %v172
    %583 = vmatprep.subr.mxu0 0.0
    %584 = vmatpush1.msra.mxu0 %v171
    %585 = vmatprep.subr.mxu0 0.0
    %586 = vmatpush2.msra.mxu0 0.0
    %587 = vmatprep.subr.mxu0 0.0
    %588 = vmatpush2.msra.mxu0 0.0
    %589 = vmatprep.subr.mxu0 0.0
    %590 = vmatpush2.msra.mxu0 0.0
    %591 = vmatprep.subr.mxu0 0.0
    %592 = vmatpush2.msra.mxu0 0.0
    %593 = vmatprep.subr.mxu0 0.0
    %594 = vmatpush2.msra.mxu0 0.0
    %595 = vmatprep.subr.mxu0 0.0
    %596 = vmatpush2.msra.mxu0 0.0
    %597 = vmatprep.subr.mxu0 0.0
    %598 = vmatpush2.msra.mxu0 0.0
    %599 = vmatprep.subr.mxu0 0.0
    %600 = vmatpush2.msra.mxu0 0.0
    %601 = vmatprep.subr.mxu0 0.0
    %602 = vmatpush2.msra.mxu0 0.0
    %603 = vmatprep.subr.mxu0 0.0
    %604 = vmatpush2.msra.mxu0 0.0
    %605 = vmatprep.subr.mxu0 0.0
    %606 = vmatpush2.msra.mxu0 0.0
    %607 = vmatprep.subr.mxu0 0.0
    %608 = vmatpush2.msra.mxu0 0.0
    %609 = vmatprep.subr.mxu0 0.0
    %610 = vmatpush2.msra.mxu0 0.0
    %611 = vmatprep.subr.mxu0 0.0
    %612 = vmatpush2.msra.mxu0 0.0
    %613 = vmatprep.subr.mxu0 0.0
    %614 = vmatpush2.msra.mxu0 0.0
    %615 = vmatprep.subr.mxu0 0.0
    %616 = vmatpush2.msra.mxu0 0.0
    %617 = vmatprep.mubr.f32.mxu0 0.0
    %618 = vmatmul.mubr.f32.gmra.mxu0 %v551
    %v619 = vpop.f32.mrf.mxu0
    %v620 = vadd.f32 0.0, %v619
    %v621 = vpop.f32.mrf.mxu0
    %622 = vdwg.mxu0
    %v623 = vadd.f32 %v153, %v620
    %v624 = vtanh.pop %v623
    %v625 = vmul.f32 %v178, %v624
    %v626 = vadd.f32 %v625, %v179
    %628 = vrot.lane.b32.xlu0 %v626, 96
    %v629 = vpop.permute.xlu0 %628
    %v631 = vmul.f32 %v626, %v629
    %632 = vrot.lane.b32.xlu0 %v626, 64
    %v633 = vpop.permute.xlu0 %632
    %v635 = vmul.f32 %v544, %v633
    %v636 = vadd.f32 %v631, %v635
    %v637 = vtanh.pop %v636
    %638 = vrot.lane.b32.xlu0 %v626, 32
    %v639 = vpop.permute.xlu0 %638
    %v641 = vmul.f32 %v637, %v639
    %v643 = vsel %vm180, %v641, 0
    %645 = vmatprep.subr.mxu0 0.0
    %646 = vmatpush1.msra.mxu0 0.0
    %647 = vmatprep.subr.mxu0 0.0
    %648 = vmatpush1.msra.mxu0 0.0
    %649 = vmatprep.subr.mxu0 0.0
    %650 = vmatpush1.msra.mxu0 0.0
    %651 = vmatprep.subr.mxu0 0.0
    %652 = vmatpush1.msra.mxu0 0.0
    %653 = vmatprep.subr.mxu0 0.0
    %654 = vmatpush1.msra.mxu0 0.0
    %655 = vmatprep.subr.mxu0 0.0
    %656 = vmatpush1.msra.mxu0 0.0
    %657 = vmatprep.subr.mxu0 0.0
    %658 = vmatpush1.msra.mxu0 0.0
    %659 = vmatprep.subr.mxu0 0.0
    %660 = vmatpush1.msra.mxu0 0.0
    %661 = vmatprep.subr.mxu0 0.0
    %662 = vmatpush1.msra.mxu0 0.0
    %663 = vmatprep.subr.mxu0 0.0
    %664 = vmatpush1.msra.mxu0 0.0
    %665 = vmatprep.subr.mxu0 0.0
    %666 = vmatpush1.msra.mxu0 0.0
    %667 = vmatprep.subr.mxu0 0.0
    %668 = vmatpush1.msra.mxu0 0.0
    %669 = vmatprep.subr.mxu0 0.0
    %670 = vmatpush1.msra.mxu0 %v174
    %671 = vmatprep.subr.mxu0 0.0
    %672 = vmatpush1.msra.mxu0 %v173
    %673 = vmatprep.subr.mxu0 0.0
    %674 = vmatpush1.msra.mxu0 %v172
    %675 = vmatprep.subr.mxu0 0.0
    %676 = vmatpush1.msra.mxu0 %v171
    %677 = vmatprep.subr.mxu0 0.0
    %678 = vmatpush2.msra.mxu0 0.0
    %679 = vmatprep.subr.mxu0 0.0
    %680 = vmatpush2.msra.mxu0 0.0
    %681 = vmatprep.subr.mxu0 0.0
    %682 = vmatpush2.msra.mxu0 0.0
    %683 = vmatprep.subr.mxu0 0.0
    %684 = vmatpush2.msra.mxu0 0.0
    %685 = vmatprep.subr.mxu0 0.0
    %686 = vmatpush2.msra.mxu0 0.0
    %687 = vmatprep.subr.mxu0 0.0
    %688 = vmatpush2.msra.mxu0 0.0
    %689 = vmatprep.subr.mxu0 0.0
    %690 = vmatpush2.msra.mxu0 0.0
    %691 = vmatprep.subr.mxu0 0.0
    %692 = vmatpush2.msra.mxu0 0.0
    %693 = vmatprep.subr.mxu0 0.0
    %694 = vmatpush2.msra.mxu0 0.0
    %695 = vmatprep.subr.mxu0 0.0
    %696 = vmatpush2.msra.mxu0 0.0
    %697 = vmatprep.subr.mxu0 0.0
    %698 = vmatpush2.msra.mxu0 0.0
    %699 = vmatprep.subr.mxu0 0.0
    %700 = vmatpush2.msra.mxu0 0.0
    %701 = vmatprep.subr.mxu0 0.0
    %702 = vmatpush2.msra.mxu0 0.0
    %703 = vmatprep.subr.mxu0 0.0
    %704 = vmatpush2.msra.mxu0 0.0
    %705 = vmatprep.subr.mxu0 0.0
    %706 = vmatpush2.msra.mxu0 0.0
    %707 = vmatprep.subr.mxu0 0.0
    %708 = vmatpush2.msra.mxu0 0.0
    %709 = vmatprep.mubr.f32.mxu0 0.0
    %710 = vmatmul.mubr.f32.gmra.mxu0 %v643
    %v711 = vpop.f32.mrf.mxu0
    %v712 = vadd.f32 0.0, %v711
    %v713 = vpop.f32.mrf.mxu0
    %714 = vdwg.mxu0
    %v715 = vadd.f32 %v158, %v712
    %v716 = vtanh.pop %v715
    %v717 = vmul.f32 %v178, %v716
    %v718 = vadd.f32 %v717, %v179
    %720 = vrot.lane.b32.xlu0 %v718, 96
    %v721 = vpop.permute.xlu0 %720
    %v723 = vmul.f32 %v718, %v721
    %724 = vrot.lane.b32.xlu0 %v718, 64
    %v725 = vpop.permute.xlu0 %724
    %v727 = vmul.f32 %v636, %v725
    %v728 = vadd.f32 %v723, %v727
    %v729 = vtanh.pop %v728
    %730 = vrot.lane.b32.xlu0 %v718, 32
    %v731 = vpop.permute.xlu0 %730
    %v733 = vmul.f32 %v729, %v731
    %v735 = vsel %vm180, %v733, 0
    %737 = vmatprep.subr.mxu0 0.0
    %738 = vmatpush1.msra.mxu0 0.0
    %739 = vmatprep.subr.mxu0 0.0
    %740 = vmatpush1.msra.mxu0 0.0
    %741 = vmatprep.subr.mxu0 0.0
    %742 = vmatpush1.msra.mxu0 0.0
    %743 = vmatprep.subr.mxu0 0.0
    %744 = vmatpush1.msra.mxu0 0.0
    %745 = vmatprep.subr.mxu0 0.0
    %746 = vmatpush1.msra.mxu0 0.0
    %747 = vmatprep.subr.mxu0 0.0
    %748 = vmatpush1.msra.mxu0 0.0
    %749 = vmatprep.subr.mxu0 0.0
    %750 = vmatpush1.msra.mxu0 0.0
    %751 = vmatprep.subr.mxu0 0.0
    %752 = vmatpush1.msra.mxu0 0.0
    %753 = vmatprep.subr.mxu0 0.0
    %754 = vmatpush1.msra.mxu0 0.0
    %755 = vmatprep.subr.mxu0 0.0
    %756 = vmatpush1.msra.mxu0 0.0
    %757 = vmatprep.subr.mxu0 0.0
    %758 = vmatpush1.msra.mxu0 0.0
    %759 = vmatprep.subr.mxu0 0.0
    %760 = vmatpush1.msra.mxu0 0.0
    %761 = vmatprep.subr.mxu0 0.0
    %762 = vmatpush1.msra.mxu0 %v174
    %763 = vmatprep.subr.mxu0 0.0
    %764 = vmatpush1.msra.mxu0 %v173
    %765 = vmatprep.subr.mxu0 0.0
    %766 = vmatpush1.msra.mxu0 %v172
    %767 = vmatprep.subr.mxu0 0.0
    %768 = vmatpush1.msra.mxu0 %v171
    %769 = vmatprep.subr.mxu0 0.0
    %770 = vmatpush2.msra.mxu0 0.0
    %771 = vmatprep.subr.mxu0 0.0
    %772 = vmatpush2.msra.mxu0 0.0
    %773 = vmatprep.subr.mxu0 0.0
    %774 = vmatpush2.msra.mxu0 0.0
    %775 = vmatprep.subr.mxu0 0.0
    %776 = vmatpush2.msra.mxu0 0.0
    %777 = vmatprep.subr.mxu0 0.0
    %778 = vmatpush2.msra.mxu0 0.0
    %779 = vmatprep.subr.mxu0 0.0
    %780 = vmatpush2.msra.mxu0 0.0
    %781 = vmatprep.subr.mxu0 0.0
    %782 = vmatpush2.msra.mxu0 0.0
    %783 = vmatprep.subr.mxu0 0.0
    %784 = vmatpush2.msra.mxu0 0.0
    %785 = vmatprep.subr.mxu0 0.0
    %786 = vmatpush2.msra.mxu0 0.0
    %787 = vmatprep.subr.mxu0 0.0
    %788 = vmatpush2.msra.mxu0 0.0
    %789 = vmatprep.subr.mxu0 0.0
    %790 = vmatpush2.msra.mxu0 0.0
    %791 = vmatprep.subr.mxu0 0.0
    %792 = vmatpush2.msra.mxu0 0.0
    %793 = vmatprep.subr.mxu0 0.0
    %794 = vmatpush2.msra.mxu0 0.0
    %795 = vmatprep.subr.mxu0 0.0
    %796 = vmatpush2.msra.mxu0 0.0
    %797 = vmatprep.subr.mxu0 0.0
    %798 = vmatpush2.msra.mxu0 0.0
    %799 = vmatprep.subr.mxu0 0.0
    %800 = vmatpush2.msra.mxu0 0.0
    %801 = vmatprep.mubr.f32.mxu0 0.0
    %802 = vmatmul.mubr.f32.gmra.mxu0 %v735
    %v803 = vpop.f32.mrf.mxu0
    %v804 = vadd.f32 0.0, %v803
    %v805 = vpop.f32.mrf.mxu0
    %806 = vdwg.mxu0
    %v807 = vadd.f32 %v163, %v804
    %v808 = vtanh.pop %v807
    %v809 = vmul.f32 %v178, %v808
    %v810 = vadd.f32 %v809, %v179
    %812 = vrot.lane.b32.xlu0 %v810, 96
    %v813 = vpop.permute.xlu0 %812
    %v815 = vmul.f32 %v810, %v813
    %816 = vrot.lane.b32.xlu0 %v810, 64
    %v817 = vpop.permute.xlu0 %816
    %v819 = vmul.f32 %v728, %v817
    %v820 = vadd.f32 %v815, %v819
    %v821 = vtanh.pop %v820
    %822 = vrot.lane.b32.xlu0 %v810, 32
    %v823 = vpop.permute.xlu0 %822
    %v825 = vmul.f32 %v821, %v823
    %v827 = vsel %vm180, %v825, 0
    %829 = vmatprep.subr.mxu0 0.0
    %830 = vmatpush1.msra.mxu0 0.0
    %831 = vmatprep.subr.mxu0 0.0
    %832 = vmatpush1.msra.mxu0 0.0
    %833 = vmatprep.subr.mxu0 0.0
    %834 = vmatpush1.msra.mxu0 0.0
    %835 = vmatprep.subr.mxu0 0.0
    %836 = vmatpush1.msra.mxu0 0.0
    %837 = vmatprep.subr.mxu0 0.0
    %838 = vmatpush1.msra.mxu0 0.0
    %839 = vmatprep.subr.mxu0 0.0
    %840 = vmatpush1.msra.mxu0 0.0
    %841 = vmatprep.subr.mxu0 0.0
    %842 = vmatpush1.msra.mxu0 0.0
    %843 = vmatprep.subr.mxu0 0.0
    %844 = vmatpush1.msra.mxu0 0.0
    %845 = vmatprep.subr.mxu0 0.0
    %846 = vmatpush1.msra.mxu0 0.0
    %847 = vmatprep.subr.mxu0 0.0
    %848 = vmatpush1.msra.mxu0 0.0
    %849 = vmatprep.subr.mxu0 0.0
    %850 = vmatpush1.msra.mxu0 0.0
    %851 = vmatprep.subr.mxu0 0.0
    %852 = vmatpush1.msra.mxu0 0.0
    %853 = vmatprep.subr.mxu0 0.0
    %854 = vmatpush1.msra.mxu0 %v174
    %855 = vmatprep.subr.mxu0 0.0
    %856 = vmatpush1.msra.mxu0 %v173
    %857 = vmatprep.subr.mxu0 0.0
    %858 = vmatpush1.msra.mxu0 %v172
    %859 = vmatprep.subr.mxu0 0.0
    %860 = vmatpush1.msra.mxu0 %v171
    %861 = vmatprep.subr.mxu0 0.0
    %862 = vmatpush2.msra.mxu0 0.0
    %863 = vmatprep.subr.mxu0 0.0
    %864 = vmatpush2.msra.mxu0 0.0
    %865 = vmatprep.subr.mxu0 0.0
    %866 = vmatpush2.msra.mxu0 0.0
    %867 = vmatprep.subr.mxu0 0.0
    %868 = vmatpush2.msra.mxu0 0.0
    %869 = vmatprep.subr.mxu0 0.0
    %870 = vmatpush2.msra.mxu0 0.0
    %871 = vmatprep.subr.mxu0 0.0
    %872 = vmatpush2.msra.mxu0 0.0
    %873 = vmatprep.subr.mxu0 0.0
    %874 = vmatpush2.msra.mxu0 0.0
    %875 = vmatprep.subr.mxu0 0.0
    %876 = vmatpush2.msra.mxu0 0.0
    %877 = vmatprep.subr.mxu0 0.0
    %878 = vmatpush2.msra.mxu0 0.0
    %879 = vmatprep.subr.mxu0 0.0
    %880 = vmatpush2.msra.mxu0 0.0
    %881 = vmatprep.subr.mxu0 0.0
    %882 = vmatpush2.msra.mxu0 0.0
    %883 = vmatprep.subr.mxu0 0.0
    %884 = vmatpush2.msra.mxu0 0.0
    %885 = vmatprep.subr.mxu0 0.0
    %886 = vmatpush2.msra.mxu0 0.0
    %887 = vmatprep.subr.mxu0 0.0
    %888 = vmatpush2.msra.mxu0 0.0
    %889 = vmatprep.subr.mxu0 0.0
    %890 = vmatpush2.msra.mxu0 0.0
    %891 = vmatprep.subr.mxu0 0.0
    %892 = vmatpush2.msra.mxu0 0.0
    %893 = vmatprep.mubr.f32.mxu0 0.0
    %894 = vmatmul.mubr.f32.gmra.mxu0 %v827
    %v895 = vpop.f32.mrf.mxu0
    %v896 = vadd.f32 0.0, %v895
    %v897 = vpop.f32.mrf.mxu0
    %898 = vdwg.mxu0
    %v899 = vadd.f32 %v168, %v896
    %v900 = vtanh.pop %v899
    %v901 = vmul.f32 %v178, %v900
    %v902 = vadd.f32 %v901, %v179
    %904 = vrot.lane.b32.xlu0 %v902, 96
    %v905 = vpop.permute.xlu0 %904
    %v907 = vmul.f32 %v902, %v905
    %908 = vrot.lane.b32.xlu0 %v902, 64
    %v909 = vpop.permute.xlu0 %908
    %v911 = vmul.f32 %v820, %v909
    %v912 = vadd.f32 %v907, %v911
    %v913 = vtanh.pop %v912
    %914 = vrot.lane.b32.xlu0 %v902, 32
    %v915 = vpop.permute.xlu0 %914
    %v917 = vmul.f32 %v913, %v915
    %v918 = vld [vmem:[%s4] sm:$0xff]
    %v919 = vld [vmem:[%s4 + $0x8] sm:$0xff]
    %v920 = vld [vmem:[%s4 + $0x10] sm:$0xff]
    %v921 = vld [vmem:[%s4 + $0x18] sm:$0xff]
    %v922 = vld [vmem:[%s5] sm:$0x1]
    %v924 = vlaneseq
    %v925 = vshrl.u32 %v924, 7
    %v926 = vsub.s32 0, %v925
    %v927 = vrot.slane %v922, %v926
    %v930 = vsel %vm180, %v917, 0
    %932 = vmatprep.subr.mxu0 0.0
    %933 = vmatpush1.msra.mxu0 0.0
    %934 = vmatprep.subr.mxu0 0.0
    %935 = vmatpush1.msra.mxu0 0.0
    %936 = vmatprep.subr.mxu0 0.0
    %937 = vmatpush1.msra.mxu0 0.0
    %938 = vmatprep.subr.mxu0 0.0
    %939 = vmatpush1.msra.mxu0 0.0
    %940 = vmatprep.subr.mxu0 0.0
    %941 = vmatpush1.msra.mxu0 0.0
    %942 = vmatprep.subr.mxu0 0.0
    %943 = vmatpush1.msra.mxu0 0.0
    %944 = vmatprep.subr.mxu0 0.0
    %945 = vmatpush1.msra.mxu0 0.0
    %946 = vmatprep.subr.mxu0 0.0
    %947 = vmatpush1.msra.mxu0 0.0
    %948 = vmatprep.subr.mxu0 0.0
    %949 = vmatpush1.msra.mxu0 0.0
    %950 = vmatprep.subr.mxu0 0.0
    %951 = vmatpush1.msra.mxu0 0.0
    %952 = vmatprep.subr.mxu0 0.0
    %953 = vmatpush1.msra.mxu0 0.0
    %954 = vmatprep.subr.mxu0 0.0
    %955 = vmatpush1.msra.mxu0 0.0
    %956 = vmatprep.subr.mxu0 0.0
    %957 = vmatpush1.msra.mxu0 %v921
    %958 = vmatprep.subr.mxu0 0.0
    %959 = vmatpush1.msra.mxu0 %v920
    %960 = vmatprep.subr.mxu0 0.0
    %961 = vmatpush1.msra.mxu0 %v919
    %962 = vmatprep.subr.mxu0 0.0
    %963 = vmatpush1.msra.mxu0 %v918
    %964 = vmatprep.subr.mxu0 0.0
    %965 = vmatpush2.msra.mxu0 0.0
    %966 = vmatprep.subr.mxu0 0.0
    %967 = vmatpush2.msra.mxu0 0.0
    %968 = vmatprep.subr.mxu0 0.0
    %969 = vmatpush2.msra.mxu0 0.0
    %970 = vmatprep.subr.mxu0 0.0
    %971 = vmatpush2.msra.mxu0 0.0
    %972 = vmatprep.subr.mxu0 0.0
    %973 = vmatpush2.msra.mxu0 0.0
    %974 = vmatprep.subr.mxu0 0.0
    %975 = vmatpush2.msra.mxu0 0.0
    %976 = vmatprep.subr.mxu0 0.0
    %977 = vmatpush2.msra.mxu0 0.0
    %978 = vmatprep.subr.mxu0 0.0
    %979 = vmatpush2.msra.mxu0 0.0
    %980 = vmatprep.subr.mxu0 0.0
    %981 = vmatpush2.msra.mxu0 0.0
    %982 = vmatprep.subr.mxu0 0.0
    %983 = vmatpush2.msra.mxu0 0.0
    %984 = vmatprep.subr.mxu0 0.0
    %985 = vmatpush2.msra.mxu0 0.0
    %986 = vmatprep.subr.mxu0 0.0
    %987 = vmatpush2.msra.mxu0 0.0
    %988 = vmatprep.subr.mxu0 0.0
    %989 = vmatpush2.msra.mxu0 0.0
    %990 = vmatprep.subr.mxu0 0.0
    %991 = vmatpush2.msra.mxu0 0.0
    %992 = vmatprep.subr.mxu0 0.0
    %993 = vmatpush2.msra.mxu0 0.0
    %994 = vmatprep.subr.mxu0 0.0
    %995 = vmatpush2.msra.mxu0 0.0
    %996 = vmatprep.mubr.f32.mxu0 0.0
    %997 = vmatmul.mubr.f32.gmra.mxu0 %v930
    %v998 = vpop.f32.mrf.mxu0
    %v999 = vadd.f32 %v927, %v998
    %v1000 = vpop.f32.mrf.mxu0
    %1001 = vdwg.mxu0
    %vm1002 = vcmask 80896
    %v1003 = vsel %vm1002, %v999, -inf
    %1004 = vmax.xlane.f32.xlu0 %v1003
    %v1005 = vpop.xlane.xlu0 %1004
    %v1006 = vsub.f32 %v999, %v1005
    %v1007 = vmul.f32 %v1006, 1.442695
    %v1008 = vpow.pop %v1007
    %v1009 = vsel %vm1002, %v1008, 0.0
    %1010 = vadd.xlane.f32.xlu0 %v1009
    %v1011 = vpop.xlane.xlu0 %1010
    %v1012 = vrcp.pop %v1011
    %v1013 = vmul.f32 %v1008, %v1012
    %1014 = vst.msk [vmem:[#allocation2] sm:$0xff] %vm1002, %v1013
    // Predicated region
    $region26: #{lstm_forward.1} parent=1 // pred_check
      _
    $region27: #{lstm_forward.1} parent=1 // pred_check_branch
      %1016 = sbr.rel (0) target = $region29
    $region28: #{lstm_forward.1} parent=1 // pred_region
      %s1018 = ssub.s32 128, 128
      %1019 = vsyncadd [#allocation3], %s1018
      %s1021 = sshll.u32 [#allocation2], 4
      %s1022 = int_to_ptr.vmem [resolvable:$true] %s1021
      %1024 = dma.vmem_to_hbm [thread:$0]  %s1022, 128, %s6, [#allocation3]
    $region29: #{lstm_forward.1} parent=1 // pred_fallthru
      _
    // Predicated region
    $region30: #{lstm_forward.1} parent=1 // pred_check
      _
    $region31: #{lstm_forward.1} parent=1 // pred_check_branch
      %1026 = sbr.rel (0) target = $region33
    $region32: #{lstm_forward.1} parent=1 // pred_region
      %1027 = dma.done [#allocation3], 128
    $region33: #{lstm_forward.1} parent=1 // pred_fallthru
      _
    %1028 = vsyncpa [#allocation3], 1

</llo_original>
